<compile_context>
chip_gen: v6e
topology: v6e:2x2x1
jax: 0.10.0
libtpu: 0.0.40
codegen_flags: <defaults>
</compile_context>

<pallas_src>
import jax
import jax.numpy as jnp
from jax.experimental import pallas as pl
from jax.experimental.pallas import tpu as pltpu


def _controller_kernel(x_ref, h0_ref, wihT_ref, whhT_ref, bias_ref,
                       wdecT_ref, bdec_ref, mask_ref, gumbel_ref,
                       logp_ref, act_ref, h_scratch):
    L, K, E = x_ref.shape
    Nmax = mask_ref.shape[-1]
    neg_inf = jnp.float32(-1e30)

    # ---- Phase 0: batched input projection (off the serial critical path) -------------
    # xproj[t] = x[t] @ W_ih^T + (b_ih + b_hh), done as one (L*K, E)x(E, H) matmul.
    x2 = x_ref[...].reshape(L * K, E)
    xproj = (jnp.dot(x2, wihT_ref[...], preferred_element_type=jnp.float32)
             + bias_ref[...]).reshape(L, K, -1)                       # (L, K, H)

    # ---- Phase 1: serial recurrence (the only truly serial part) ----------------------
    # h_t = tanh(xproj[t] + h_{t-1} @ W_hh^T): a single small MXU push + tanh per step.
    h = h0_ref[...]                                                   # (K, H)
    for t in range(L):                 # L is small & static -> unrolled for LLO scheduling
        h = jnp.tanh(xproj[t] + jnp.dot(h, whhT_ref[...],
                                        preferred_element_type=jnp.float32))
        h_scratch[t] = h

    # ---- Phase 2: batched decoders + masked softmax + Gumbel-max + gather -------------
    hs = h_scratch[...]                                               # (L, K, H)
    logits = (jnp.einsum('lkh,lhn->lkn', hs, wdecT_ref[...],
                         preferred_element_type=jnp.float32)
              + bdec_ref[...])                                        # (L, K, Nmax)
    valid = mask_ref[...] > 0.0                                       # (L, 1, Nmax)
    masked = jnp.where(valid, logits, neg_inf)

    m = jnp.max(masked, axis=-1, keepdims=True)
    e = jnp.exp(masked - m)
    s = jnp.sum(e, axis=-1, keepdims=True)
    logprob = masked - m - jnp.log(s)                                 # (L, K, Nmax) log-softmax

    # Gumbel-max categorical sample (stands in for torch Categorical.sample).
    z = jnp.where(valid, logprob + gumbel_ref[...], neg_inf)          # (L, K, Nmax)
    n_iota = jax.lax.broadcasted_iota(jnp.int32, z.shape, 2)
    zmax = jnp.max(z, axis=-1, keepdims=True)
    cand = jnp.where(z >= zmax, n_iota, Nmax)                         # sentinel on non-max lanes
    action = jnp.min(cand, axis=-1, keepdims=True)                    # (L, K, 1) first-max index

    # Gather log-prob at the sampled action (action always lands on a valid lane).
    sel = jnp.where(n_iota == action, logprob, 0.0)
    logp = jnp.sum(sel, axis=-1)                                      # (L, K)

    # Single bulk store per output (no per-step masked row stores).
    logp_ref[...] = logp
    act_ref[...] = action[..., 0].astype(jnp.int32)


def controller_forward(x, h_t, params, layer_list, gumbel):
    """x: (L, K, E) one-hot float32, h_t: (1, K, H). Returns (log_p (L, K), actions (L, K))."""
    W_ih, W_hh, b_ih, b_hh, dec_w, dec_b = params
    L, K, E = x.shape
    H = W_ih.shape[0]
    Nmax = max(layer_list)
    assert h_t.shape == (1, K, H), "kernel assumes a single-layer nn.RNN (num_layers == 1)"

    # Pad the batch ("round" k) up to a sublane multiple of 8 for clean f32 layouts.
    K_pad = ((K + 7) // 8) * 8
    pad_k = K_pad - K
    x_p = jnp.pad(x, ((0, 0), (0, pad_k), (0, 0)))
    h0 = jnp.pad(h_t.reshape(K, H), ((0, pad_k), (0, 0)))
    gumbel_p = jnp.pad(gumbel, ((0, 0), (0, pad_k), (0, 0)))

    # Glue: pack / pad decoder params, pre-transpose matmul weights, pre-sum RNN biases.
    wdecT = jnp.stack([jnp.pad(w.T, ((0, 0), (0, Nmax - w.shape[0]))) for w in dec_w])      # (L, H, Nmax)
    bdec = jnp.stack([jnp.pad(b, (0, Nmax - b.shape[0]))[None, :] for b in dec_b])          # (L, 1, Nmax)
    mask = jnp.stack([jnp.pad(jnp.ones((n,), jnp.float32), (0, Nmax - n))[None, :]
                      for n in layer_list])                                                 # (L, 1, Nmax)
    bias = (b_ih + b_hh)[None, :]                                                           # (1, H)

    vmem = pl.BlockSpec(memory_space=pltpu.MemorySpace.VMEM)
    logp, actions = pl.pallas_call(
        _controller_kernel,
        out_shape=(jax.ShapeDtypeStruct((L, K_pad), jnp.float32),
                   jax.ShapeDtypeStruct((L, K_pad), jnp.int32)),
        in_specs=[vmem] * 9,
        out_specs=(vmem, vmem),
        scratch_shapes=[pltpu.VMEM((L, K_pad, H), jnp.float32)],
    )(x_p, h0, W_ih.T, W_hh.T, bias, wdecT, bdec, mask, gumbel_p)
    return logp[:, :K], actions[:, :K]


def reference_forward(x, h_t, params, layer_list, gumbel):
    """Pure-JAX reference mirroring the PyTorch forward (same gumbel noise)."""
    W_ih, W_hh, b_ih, b_hh, dec_w, dec_b = params
    L, K, _ = x.shape
    h = h_t.reshape(K, -1)
    logps, acts = [], []
    for t in range(L):
        h = jnp.tanh(x[t] @ W_ih.T + b_ih + h @ W_hh.T + b_hh)
        logits = h @ dec_w[t].T + dec_b[t]
        logprob = jax.nn.log_softmax(logits, axis=-1)
        n = layer_list[t]
        a = jnp.argmax(logprob + gumbel[t][:, :n], axis=-1)
        acts.append(a.astype(jnp.int32))
        logps.append(jnp.take_along_axis(logprob, a[:, None], axis=1)[:, 0])
    return jnp.stack(logps), jnp.stack(acts)


def init_params(key, layer_list, E, H):
    """Deterministic uniform(-0.1, 0.1) init; decoder biases zero (matches init_parameters)."""
    init = 0.1
    keys = jax.random.split(key, 4 + len(layer_list))
    u = lambda k, shape: jax.random.uniform(k, shape, jnp.float32, -init, init)
    W_ih = u(keys[0], (H, E))
    W_hh = u(keys[1], (H, H))
    b_ih = u(keys[2], (H,))
    b_hh = u(keys[3], (H,))
    dec_w = [u(keys[4 + i], (n, H)) for i, n in enumerate(layer_list)]
    dec_b = [jnp.zeros((n,), jnp.float32) for n in layer_list]
    return W_ih, W_hh, b_ih, b_hh, dec_w, dec_b


if __name__ == "__main__":
    layer_list = [12, 10, 16]     # output channels per conv layer -> one decoder each
    L = len(layer_list)           # RNN seq length
    K = 4                         # batch ("round") k
    E = 64                        # embedding_dim (small)
    H = 32                        # hidden_dim (small)
    Nmax = max(layer_list)

    root = jax.random.PRNGKey(0)
    k_param, k_state, k_gumbel = jax.random.split(root, 3)

    params = init_params(k_param, layer_list, E, H)

    # reset(k): one-hot state of random ints in [0, min(layer_list)]
    idx = jax.random.randint(k_state, (L, K), 0, min(layer_list) + 1)
    x = jax.nn.one_hot(idx, E, dtype=jnp.float32)                     # (L, K, E)
    h_t = jnp.zeros((1, K, H), jnp.float32)

    # Shared Gumbel noise for sampling (categorical via Gumbel-max).
    # TODO(synk): torch Categorical.sample uses torch's RNG stream; reproduced here with
    # JAX PRNG Gumbel-max noise shared between kernel and reference.
    u = jax.random.uniform(k_gumbel, (L, K, Nmax), jnp.float32, 1e-6, 1.0 - 1e-6)
    gumbel = -jnp.log(-jnp.log(u))

    logp, actions = controller_forward(x, h_t, params, layer_list, gumbel)
    logp, actions = jax.block_until_ready((logp, actions))

    logp_ref, actions_ref = reference_forward(x, h_t, params, layer_list, gumbel)
    assert jnp.all(actions == actions_ref), (actions, actions_ref)
    assert jnp.allclose(logp, logp_ref, rtol=1e-4, atol=1e-4), (logp, logp_ref)

    print("KERNEL_OK")
</pallas_src>

<mosaic_0001>
module attributes {stable_mosaic.version = 11 : i64} {
  func.func @_controller_kernel(%arg0: memref<3x8x64xf32, #tpu.memory_space<vmem>>, %arg1: memref<8x32xf32, #tpu.memory_space<vmem>>, %arg2: memref<64x32xf32, #tpu.memory_space<vmem>>, %arg3: memref<32x32xf32, #tpu.memory_space<vmem>>, %arg4: memref<1x32xf32, #tpu.memory_space<vmem>>, %arg5: memref<3x32x16xf32, #tpu.memory_space<vmem>>, %arg6: memref<3x1x16xf32, #tpu.memory_space<vmem>>, %arg7: memref<3x1x16xf32, #tpu.memory_space<vmem>>, %arg8: memref<3x8x16xf32, #tpu.memory_space<vmem>>, %arg9: memref<3x8xf32, #tpu.memory_space<vmem>>, %arg10: memref<3x8xi32, #tpu.memory_space<vmem>>, %arg11: memref<3x8x32xf32, #tpu.memory_space<vmem>>) attributes {dimension_semantics = [], scalar_prefetch = 0 : i64, scratch_operands = 1 : i64, tpu.core_type = #tpu.core_type<tc>} {
    %c0 = arith.constant 0 : index
    %c0_0 = arith.constant 0 : index
    %c0_1 = arith.constant 0 : index
    %0 = vector.load %arg0[%c0, %c0_0, %c0_1] : memref<3x8x64xf32, #tpu.memory_space<vmem>>, vector<3x8x64xf32>
    %1 = vector.shape_cast %0 : vector<3x8x64xf32> to vector<24x64xf32>
    %c0_2 = arith.constant 0 : index
    %c0_3 = arith.constant 0 : index
    %2 = vector.load %arg2[%c0_2, %c0_3] : memref<64x32xf32, #tpu.memory_space<vmem>>, vector<64x32xf32>
    %cst = arith.constant dense<0.000000e+00> : vector<24x32xf32>
    %3 = tpu.matmul %1, %2, %cst {dimension_numbers = #tpu.dot_dimension_numbers<[1], [0], [0], [1], [0, 0, 1, 1], [], []>} : vector<24x64xf32>, vector<64x32xf32>, vector<24x32xf32> -> vector<24x32xf32>
    %c0_4 = arith.constant 0 : index
    %c0_5 = arith.constant 0 : index
    %4 = vector.load %arg4[%c0_4, %c0_5] : memref<1x32xf32, #tpu.memory_space<vmem>>, vector<1x32xf32>
    %5 = vector.broadcast %4 : vector<1x32xf32> to vector<24x32xf32>
    %6 = arith.addf %3, %5 : vector<24x32xf32>
    %7 = vector.shape_cast %6 : vector<24x32xf32> to vector<3x8x32xf32>
    %c0_6 = arith.constant 0 : index
    %c0_7 = arith.constant 0 : index
    %8 = vector.load %arg1[%c0_6, %c0_7] : memref<8x32xf32, #tpu.memory_space<vmem>>, vector<8x32xf32>
    %9 = vector.extract_strided_slice %7 {offsets = [0, 0, 0], sizes = [1, 8, 32], strides = [1, 1, 1]} : vector<3x8x32xf32> to vector<1x8x32xf32>
    %10 = vector.shape_cast %9 : vector<1x8x32xf32> to vector<8x32xf32>
    %c0_8 = arith.constant 0 : index
    %c0_9 = arith.constant 0 : index
    %11 = vector.load %arg3[%c0_8, %c0_9] : memref<32x32xf32, #tpu.memory_space<vmem>>, vector<32x32xf32>
    %cst_10 = arith.constant dense<0.000000e+00> : vector<8x32xf32>
    %12 = tpu.matmul %8, %11, %cst_10 {dimension_numbers = #tpu.dot_dimension_numbers<[1], [0], [0], [1], [0, 0, 1, 1], [], []>} : vector<8x32xf32>, vector<32x32xf32>, vector<8x32xf32> -> vector<8x32xf32>
    %13 = arith.addf %10, %12 : vector<8x32xf32>
    %14 = math.tanh %13 : vector<8x32xf32>
    %c0_11 = arith.constant 0 : index
    %c0_12 = arith.constant 0 : index
    %c0_13 = arith.constant 0 : index
    %15 = vector.load %arg11[%c0_11, %c0_12, %c0_13] : memref<3x8x32xf32, #tpu.memory_space<vmem>>, vector<1x8x32xf32>
    %16 = vector.shape_cast %15 : vector<1x8x32xf32> to vector<8x32xf32>
    %17 = vector.shape_cast %14 : vector<8x32xf32> to vector<1x8x32xf32>
    tpu.vector_store %arg11[%c0_11, %c0_12, %c0_13], %17 {strides = array<i32>} : memref<3x8x32xf32, #tpu.memory_space<vmem>>, vector<1x8x32xf32>,
    %18 = vector.extract_strided_slice %7 {offsets = [1, 0, 0], sizes = [1, 8, 32], strides = [1, 1, 1]} : vector<3x8x32xf32> to vector<1x8x32xf32>
    %19 = vector.shape_cast %18 : vector<1x8x32xf32> to vector<8x32xf32>
    %c0_14 = arith.constant 0 : index
    %c0_15 = arith.constant 0 : index
    %20 = vector.load %arg3[%c0_14, %c0_15] : memref<32x32xf32, #tpu.memory_space<vmem>>, vector<32x32xf32>
    %cst_16 = arith.constant dense<0.000000e+00> : vector<8x32xf32>
    %21 = tpu.matmul %14, %20, %cst_16 {dimension_numbers = #tpu.dot_dimension_numbers<[1], [0], [0], [1], [0, 0, 1, 1], [], []>} : vector<8x32xf32>, vector<32x32xf32>, vector<8x32xf32> -> vector<8x32xf32>
    %22 = arith.addf %19, %21 : vector<8x32xf32>
    %23 = math.tanh %22 : vector<8x32xf32>
    %c1 = arith.constant 1 : index
    %c0_17 = arith.constant 0 : index
    %c0_18 = arith.constant 0 : index
    %24 = vector.load %arg11[%c1, %c0_17, %c0_18] : memref<3x8x32xf32, #tpu.memory_space<vmem>>, vector<1x8x32xf32>
    %25 = vector.shape_cast %24 : vector<1x8x32xf32> to vector<8x32xf32>
    %26 = vector.shape_cast %23 : vector<8x32xf32> to vector<1x8x32xf32>
    tpu.vector_store %arg11[%c1, %c0_17, %c0_18], %26 {strides = array<i32>} : memref<3x8x32xf32, #tpu.memory_space<vmem>>, vector<1x8x32xf32>,
    %27 = vector.extract_strided_slice %7 {offsets = [2, 0, 0], sizes = [1, 8, 32], strides = [1, 1, 1]} : vector<3x8x32xf32> to vector<1x8x32xf32>
    %28 = vector.shape_cast %27 : vector<1x8x32xf32> to vector<8x32xf32>
    %c0_19 = arith.constant 0 : index
    %c0_20 = arith.constant 0 : index
    %29 = vector.load %arg3[%c0_19, %c0_20] : memref<32x32xf32, #tpu.memory_space<vmem>>, vector<32x32xf32>
    %cst_21 = arith.constant dense<0.000000e+00> : vector<8x32xf32>
    %30 = tpu.matmul %23, %29, %cst_21 {dimension_numbers = #tpu.dot_dimension_numbers<[1], [0], [0], [1], [0, 0, 1, 1], [], []>} : vector<8x32xf32>, vector<32x32xf32>, vector<8x32xf32> -> vector<8x32xf32>
    %31 = arith.addf %28, %30 : vector<8x32xf32>
    %32 = math.tanh %31 : vector<8x32xf32>
    %c2 = arith.constant 2 : index
    %c0_22 = arith.constant 0 : index
    %c0_23 = arith.constant 0 : index
    %33 = vector.load %arg11[%c2, %c0_22, %c0_23] : memref<3x8x32xf32, #tpu.memory_space<vmem>>, vector<1x8x32xf32>
    %34 = vector.shape_cast %33 : vector<1x8x32xf32> to vector<8x32xf32>
    %35 = vector.shape_cast %32 : vector<8x32xf32> to vector<1x8x32xf32>
    tpu.vector_store %arg11[%c2, %c0_22, %c0_23], %35 {strides = array<i32>} : memref<3x8x32xf32, #tpu.memory_space<vmem>>, vector<1x8x32xf32>,
    %c0_24 = arith.constant 0 : index
    %c0_25 = arith.constant 0 : index
    %c0_26 = arith.constant 0 : index
    %36 = vector.load %arg11[%c0_24, %c0_25, %c0_26] : memref<3x8x32xf32, #tpu.memory_space<vmem>>, vector<3x8x32xf32>
    %c0_27 = arith.constant 0 : index
    %c0_28 = arith.constant 0 : index
    %c0_29 = arith.constant 0 : index
    %37 = vector.load %arg5[%c0_27, %c0_28, %c0_29] : memref<3x32x16xf32, #tpu.memory_space<vmem>>, vector<3x32x16xf32>
    "tpu.trace_start"() <{level = 10 : i32, message = "lkh,lhn->lkn"}> : () -> ()
    %cst_30 = arith.constant dense<0.000000e+00> : vector<3x8x16xf32>
    %38 = tpu.matmul %36, %37, %cst_30 {dimension_numbers = #tpu.dot_dimension_numbers<[2], [1], [1], [2], [0, 0, 0, 1, 1, 2], [0], [0]>} : vector<3x8x32xf32>, vector<3x32x16xf32>, vector<3x8x16xf32> -> vector<3x8x16xf32>
    "tpu.trace_stop"() : () -> ()
    %c0_31 = arith.constant 0 : index
    %c0_32 = arith.constant 0 : index
    %c0_33 = arith.constant 0 : index
    %39 = vector.load %arg6[%c0_31, %c0_32, %c0_33] : memref<3x1x16xf32, #tpu.memory_space<vmem>>, vector<3x1x16xf32>
    %40 = vector.broadcast %39 : vector<3x1x16xf32> to vector<3x8x16xf32>
    %41 = arith.addf %38, %40 : vector<3x8x16xf32>
    %c0_34 = arith.constant 0 : index
    %c0_35 = arith.constant 0 : index
    %c0_36 = arith.constant 0 : index
    %42 = vector.load %arg7[%c0_34, %c0_35, %c0_36] : memref<3x1x16xf32, #tpu.memory_space<vmem>>, vector<3x1x16xf32>
    %cst_37 = arith.constant 0.000000e+00 : f32
    %43 = vector.broadcast %cst_37 : f32 to vector<3x1x16xf32>
    %44 = arith.cmpf ogt, %42, %43 : vector<3x1x16xf32>
    %cst_38 = arith.constant -1.000000e+30 : f32
    %45 = vector.shape_cast %44 : vector<3x1x16xi1> to vector<3x1x16xi1>
    %46 = vector.broadcast %45 : vector<3x1x16xi1> to vector<3x8x16xi1>
    %47 = vector.broadcast %cst_38 : f32 to vector<3x8x16xf32>
    %48 = arith.select %46, %41, %47 : vector<3x8x16xi1>, vector<3x8x16xf32>
    %cst_39 = arith.constant dense<0xFF800000> : vector<3x8xf32>
    %49 = vector.multi_reduction <maximumf>, %48, %cst_39 [2] : vector<3x8x16xf32> to vector<3x8xf32>
    %50 = vector.shape_cast %49 : vector<3x8xf32> to vector<3x8x1xf32>
    %51 = vector.broadcast %50 : vector<3x8x1xf32> to vector<3x8x16xf32>
    %52 = arith.subf %48, %51 : vector<3x8x16xf32>
    %53 = math.exp %52 : vector<3x8x16xf32>
    %cst_40 = arith.constant dense<0.000000e+00> : vector<3x8xf32>
    %54 = vector.multi_reduction <add>, %53, %cst_40 [2] : vector<3x8x16xf32> to vector<3x8xf32>
    %55 = vector.shape_cast %54 : vector<3x8xf32> to vector<3x8x1xf32>
    %56 = vector.broadcast %50 : vector<3x8x1xf32> to vector<3x8x16xf32>
    %57 = arith.subf %48, %56 : vector<3x8x16xf32>
    %58 = math.log %55 : vector<3x8x1xf32>
    %59 = vector.broadcast %58 : vector<3x8x1xf32> to vector<3x8x16xf32>
    %60 = arith.subf %57, %59 : vector<3x8x16xf32>
    %c0_41 = arith.constant 0 : index
    %c0_42 = arith.constant 0 : index
    %c0_43 = arith.constant 0 : index
    %61 = vector.load %arg8[%c0_41, %c0_42, %c0_43] : memref<3x8x16xf32, #tpu.memory_space<vmem>>, vector<3x8x16xf32>
    %62 = arith.addf %60, %61 : vector<3x8x16xf32>
    %cst_44 = arith.constant -1.000000e+30 : f32
    %63 = vector.shape_cast %44 : vector<3x1x16xi1> to vector<3x1x16xi1>
    %64 = vector.broadcast %63 : vector<3x1x16xi1> to vector<3x8x16xi1>
    %65 = vector.broadcast %cst_44 : f32 to vector<3x8x16xf32>
    %66 = arith.select %64, %62, %65 : vector<3x8x16xi1>, vector<3x8x16xf32>
    %67 = tpu.iota {dimensions = array<i32: 2>} : vector<3x8x16xi32>
    %cst_45 = arith.constant dense<0xFF800000> : vector<3x8xf32>
    %68 = vector.multi_reduction <maximumf>, %66, %cst_45 [2] : vector<3x8x16xf32> to vector<3x8xf32>
    %69 = vector.shape_cast %68 : vector<3x8xf32> to vector<3x8x1xf32>
    %70 = vector.broadcast %69 : vector<3x8x1xf32> to vector<3x8x16xf32>
    %71 = arith.cmpf oge, %66, %70 : vector<3x8x16xf32>
    %c16_i32 = arith.constant 16 : i32
    %72 = vector.broadcast %c16_i32 : i32 to vector<3x8x16xi32>
    %73 = arith.select %71, %67, %72 : vector<3x8x16xi1>, vector<3x8x16xi32>
    %cst_46 = arith.constant dense<2147483647> : vector<3x8xi32>
    %74 = vector.multi_reduction <minsi>, %73, %cst_46 [2] : vector<3x8x16xi32> to vector<3x8xi32>
    %75 = vector.shape_cast %74 : vector<3x8xi32> to vector<3x8x1xi32>
    %76 = vector.broadcast %75 : vector<3x8x1xi32> to vector<3x8x16xi32>
    %77 = arith.cmpi eq, %67, %76 : vector<3x8x16xi32>
    %cst_47 = arith.constant 0.000000e+00 : f32
    %78 = vector.broadcast %cst_47 : f32 to vector<3x8x16xf32>
    %79 = arith.select %77, %60, %78 : vector<3x8x16xi1>, vector<3x8x16xf32>
    %cst_48 = arith.constant dense<0.000000e+00> : vector<3x8xf32>
    %80 = vector.multi_reduction <add>, %79, %cst_48 [2] : vector<3x8x16xf32> to vector<3x8xf32>
    %c0_49 = arith.constant 0 : index
    %c0_50 = arith.constant 0 : index
    %81 = vector.load %arg9[%c0_49, %c0_50] : memref<3x8xf32, #tpu.memory_space<vmem>>, vector<3x8xf32>
    tpu.vector_store %arg9[%c0_49, %c0_50], %80 {strides = array<i32>} : memref<3x8xf32, #tpu.memory_space<vmem>>, vector<3x8xf32>,
    %82 = vector.shape_cast %75 : vector<3x8x1xi32> to vector<3x8xi32>
    %c0_51 = arith.constant 0 : index
    %c0_52 = arith.constant 0 : index
    %83 = vector.load %arg10[%c0_51, %c0_52] : memref<3x8xi32, #tpu.memory_space<vmem>>, vector<3x8xi32>
    tpu.vector_store %arg10[%c0_51, %c0_52], %82 {strides = array<i32>} : memref<3x8xi32, #tpu.memory_space<vmem>>, vector<3x8xi32>,
    return
  }
}

</mosaic_0001>

<llo_original>
// kernel: tpu_custom_call.1
$region0: #{tpu_custom_call.1}
  #allocation0 [shape = 'u32[]', space=smem, size = 0x4, offset = 0x4, fixed_abs, tag = 'smem constant byte address 0x4 - core index']
  #allocation1 [shape = 'u32[144,128]{1,0:T(1,128)}', space=vmem, size = 0x12000, scoped, tag = 'internal scratch']
  #allocation2 [shape = 'f32[3,8,32]{2,1,0:T(8,128)}', space=vmem, size = 0x3000, scoped, tag = 'scratch operand']
  %s0 = inlined_call_operand.vmem [shape: f32[3,8,64], index: 0, kind: input, shape index: {}]
  %s1 = inlined_call_operand.vmem [shape: f32[8,32], index: 1, kind: input, shape index: {}]
  %s2 = inlined_call_operand.vmem [shape: f32[64,32], index: 2, kind: input, shape index: {}]
  %s3 = inlined_call_operand.vmem [shape: f32[32,32], index: 3, kind: input, shape index: {}]
  %s4 = inlined_call_operand.vmem [shape: f32[1,32], index: 4, kind: input, shape index: {}]
  %s5 = inlined_call_operand.vmem [shape: f32[3,32,16], index: 5, kind: input, shape index: {}]
  %s6 = inlined_call_operand.vmem [shape: f32[3,1,16], index: 6, kind: input, shape index: {}]
  %s7 = inlined_call_operand.vmem [shape: f32[3,1,16], index: 7, kind: input, shape index: {}]
  %s8 = inlined_call_operand.vmem [shape: f32[3,8,16], index: 8, kind: input, shape index: {}]
  %s9 = inlined_call_operand.hbm [shape: f32[3,8], index: 9, kind: output, shape index: {0}]
  %s10 = inlined_call_operand.hbm [shape: s32[3,8], index: 10, kind: output, shape index: {1}]
  %11 = xla_tuple %s9, %s10
  %s12 = sld [smem:[#allocation0]]
  $region54: #{tpu_custom_call.1} parent=0
    _
  %s14 = ssub.s32 1, %s12
  %s15 = scalar_select 0, %s14, %s12
  $region1: #{tpu_custom_call.1} parent=0
    #allocation3 [shape = 'u8[2048]{0}', space=vmem, size = 0x800, scoped, tag = 'output window, operand 0, single buffered']
    #allocation4 [shape = 's32[1]{0}', space=sflag, size = 0x4, scoped, tag = 'scoped memory for tpu_custom_call.1']
    #allocation5 [shape = 'u8[2048]{0}', space=vmem, size = 0x800, scoped, tag = 'output window, operand 1, single buffered']
    #allocation6 [shape = 's32[1]{0}', space=sflag, size = 0x4, scoped, tag = 'scoped memory for tpu_custom_call.1']
    %16 = vsyncpa [#allocation4], 0
    %17 = vsyncpa [#allocation6], 0
    // Predicated region
    $region2: #{tpu_custom_call.1} parent=1 // pred_check
      _
    $region3: #{tpu_custom_call.1} parent=1 // pred_check_branch
      %19 = sbr.rel (0) target = $region5
    $region4: #{tpu_custom_call.1} parent=1 // pred_region
      _
    $region5: #{tpu_custom_call.1} parent=1 // pred_fallthru
      _
    // Predicated region
    $region6: #{tpu_custom_call.1} parent=1 // pred_check
      _
    $region7: #{tpu_custom_call.1} parent=1 // pred_check_branch
      %21 = sbr.rel (0) target = $region9
    $region8: #{tpu_custom_call.1} parent=1 // pred_region
      _
    $region9: #{tpu_custom_call.1} parent=1 // pred_fallthru
      _
    // Predicated region
    $region10: #{tpu_custom_call.1} parent=1 // pred_check
      _
    $region11: #{tpu_custom_call.1} parent=1 // pred_check_branch
      %23 = sbr.rel (0) target = $region13
    $region12: #{tpu_custom_call.1} parent=1 // pred_region
      _
    $region13: #{tpu_custom_call.1} parent=1 // pred_fallthru
      _
    // Predicated region
    $region14: #{tpu_custom_call.1} parent=1 // pred_check
      _
    $region15: #{tpu_custom_call.1} parent=1 // pred_check_branch
      %25 = sbr.rel (0) target = $region17
    $region16: #{tpu_custom_call.1} parent=1 // pred_region
      _
    $region17: #{tpu_custom_call.1} parent=1 // pred_fallthru
      _
    // Predicated region
    $region18: #{tpu_custom_call.1} parent=1 // pred_check
      _
    $region19: #{tpu_custom_call.1} parent=1 // pred_check_branch
      %27 = sbr.rel (0) target = $region21
    $region20: #{tpu_custom_call.1} parent=1 // pred_region
      _
    $region21: #{tpu_custom_call.1} parent=1 // pred_fallthru
      _
    // Predicated region
    $region22: #{tpu_custom_call.1} parent=1 // pred_check
      _
    $region23: #{tpu_custom_call.1} parent=1 // pred_check_branch
      %29 = sbr.rel (0) target = $region25
    $region24: #{tpu_custom_call.1} parent=1 // pred_region
      _
    $region25: #{tpu_custom_call.1} parent=1 // pred_fallthru
      _
    // Predicated region
    $region26: #{tpu_custom_call.1} parent=1 // pred_check
      _
    $region27: #{tpu_custom_call.1} parent=1 // pred_check_branch
      %31 = sbr.rel (0) target = $region29
    $region28: #{tpu_custom_call.1} parent=1 // pred_region
      _
    $region29: #{tpu_custom_call.1} parent=1 // pred_fallthru
      _
    // Predicated region
    $region30: #{tpu_custom_call.1} parent=1 // pred_check
      _
    $region31: #{tpu_custom_call.1} parent=1 // pred_check_branch
      %33 = sbr.rel (0) target = $region33
    $region32: #{tpu_custom_call.1} parent=1 // pred_region
      _
    $region33: #{tpu_custom_call.1} parent=1 // pred_fallthru
      _
    // Predicated region
    $region34: #{tpu_custom_call.1} parent=1 // pred_check
      _
    $region35: #{tpu_custom_call.1} parent=1 // pred_check_branch
      %35 = sbr.rel (0) target = $region37
    $region36: #{tpu_custom_call.1} parent=1 // pred_region
      _
    $region37: #{tpu_custom_call.1} parent=1 // pred_fallthru
      _
    %v36 = vld [vmem:[%s0] sm:$0xff]
    %v37 = vld [vmem:[%s0 + $0x8] sm:$0xff]
    %v38 = vld [vmem:[%s0 + $0x10] sm:$0xff]
    %v39 = vld [vmem:[%s2] sm:$0xff]
    %v40 = vld [vmem:[%s2 + $0x8] sm:$0xff]
    %v41 = vld [vmem:[%s2 + $0x10] sm:$0xff]
    %v42 = vld [vmem:[%s2 + $0x18] sm:$0xff]
    %v43 = vld [vmem:[%s2 + $0x20] sm:$0xff]
    %v44 = vld [vmem:[%s2 + $0x28] sm:$0xff]
    %v45 = vld [vmem:[%s2 + $0x30] sm:$0xff]
    %v46 = vld [vmem:[%s2 + $0x38] sm:$0xff]
    %v47 = vld [vmem:[%s4] sm:$0x1]
    %v49 = vlaneseq
    %v50 = vshrl.u32 %v49, 7
    %v51 = vsub.s32 0, %v50
    %v52 = vrot.slane %v47, %v51
    %vm54 = vcmask 523264
    %v56 = vsel %vm54, %v36, 0
    %v59 = vsel %vm54, %v37, 0
    %v62 = vsel %vm54, %v38, 0
    %64 = vmatprep.subr.mxu0 0.0
    %65 = vmatpush1.msra.mxu0 0.0
    %66 = vmatprep.subr.mxu0 0.0
    %67 = vmatpush1.msra.mxu0 0.0
    %68 = vmatprep.subr.mxu0 0.0
    %69 = vmatpush1.msra.mxu0 0.0
    %70 = vmatprep.subr.mxu0 0.0
    %71 = vmatpush1.msra.mxu0 0.0
    %72 = vmatprep.subr.mxu0 0.0
    %73 = vmatpush1.msra.mxu0 0.0
    %74 = vmatprep.subr.mxu0 0.0
    %75 = vmatpush1.msra.mxu0 0.0
    %76 = vmatprep.subr.mxu0 0.0
    %77 = vmatpush1.msra.mxu0 0.0
    %78 = vmatprep.subr.mxu0 0.0
    %79 = vmatpush1.msra.mxu0 0.0
    %80 = vmatprep.subr.mxu0 0.0
    %81 = vmatpush1.msra.mxu0 %v46
    %82 = vmatprep.subr.mxu0 0.0
    %83 = vmatpush1.msra.mxu0 %v45
    %84 = vmatprep.subr.mxu0 0.0
    %85 = vmatpush1.msra.mxu0 %v44
    %86 = vmatprep.subr.mxu0 0.0
    %87 = vmatpush1.msra.mxu0 %v43
    %88 = vmatprep.subr.mxu0 0.0
    %89 = vmatpush1.msra.mxu0 %v42
    %90 = vmatprep.subr.mxu0 0.0
    %91 = vmatpush1.msra.mxu0 %v41
    %92 = vmatprep.subr.mxu0 0.0
    %93 = vmatpush1.msra.mxu0 %v40
    %94 = vmatprep.subr.mxu0 0.0
    %95 = vmatpush1.msra.mxu0 %v39
    %96 = vmatprep.subr.mxu0 0.0
    %97 = vmatpush2.msra.mxu0 0.0
    %98 = vmatprep.subr.mxu0 0.0
    %99 = vmatpush2.msra.mxu0 0.0
    %100 = vmatprep.subr.mxu0 0.0
    %101 = vmatpush2.msra.mxu0 0.0
    %102 = vmatprep.subr.mxu0 0.0
    %103 = vmatpush2.msra.mxu0 0.0
    %104 = vmatprep.subr.mxu0 0.0
    %105 = vmatpush2.msra.mxu0 0.0
    %106 = vmatprep.subr.mxu0 0.0
    %107 = vmatpush2.msra.mxu0 0.0
    %108 = vmatprep.subr.mxu0 0.0
    %109 = vmatpush2.msra.mxu0 0.0
    %110 = vmatprep.subr.mxu0 0.0
    %111 = vmatpush2.msra.mxu0 0.0
    %112 = vmatprep.subr.mxu0 0.0
    %113 = vmatpush2.msra.mxu0 0.0
    %114 = vmatprep.subr.mxu0 0.0
    %115 = vmatpush2.msra.mxu0 0.0
    %116 = vmatprep.subr.mxu0 0.0
    %117 = vmatpush2.msra.mxu0 0.0
    %118 = vmatprep.subr.mxu0 0.0
    %119 = vmatpush2.msra.mxu0 0.0
    %120 = vmatprep.subr.mxu0 0.0
    %121 = vmatpush2.msra.mxu0 0.0
    %122 = vmatprep.subr.mxu0 0.0
    %123 = vmatpush2.msra.mxu0 0.0
    %124 = vmatprep.subr.mxu0 0.0
    %125 = vmatpush2.msra.mxu0 0.0
    %126 = vmatprep.subr.mxu0 0.0
    %127 = vmatpush2.msra.mxu0 0.0
    %128 = vmatprep.mubr.f32.mxu0 0.0
    %129 = vmatmul.mubr.f32.gmra.mxu0 %v56
    %v130 = vpop.f32.mrf.mxu0
    %v131 = vadd.f32 %v52, %v130
    %v132 = vpop.f32.mrf.mxu0
    %133 = vmatprep.mubr.f32.mxu0 0.0
    %134 = vmatmul.mubr.f32.gmra.mxu0 %v59
    %v135 = vpop.f32.mrf.mxu0
    %v136 = vadd.f32 %v52, %v135
    %v137 = vpop.f32.mrf.mxu0
    %138 = vmatprep.mubr.f32.mxu0 0.0
    %139 = vmatmul.mubr.f32.gmra.mxu0 %v62
    %v140 = vpop.f32.mrf.mxu0
    %v141 = vadd.f32 %v52, %v140
    %v142 = vpop.f32.mrf.mxu0
    %143 = vdwg.mxu0
    %v144 = vld [vmem:[%s1] sm:$0xff]
    %v145 = vld [vmem:[%s3] sm:$0xff]
    %v146 = vld [vmem:[%s3 + $0x8] sm:$0xff]
    %v147 = vld [vmem:[%s3 + $0x10] sm:$0xff]
    %v148 = vld [vmem:[%s3 + $0x18] sm:$0xff]
    %vm149 = vcmask 261120
    %v151 = vsel %vm149, %v144, 0
    %153 = vmatprep.subr.mxu0 0.0
    %154 = vmatpush1.msra.mxu0 0.0
    %155 = vmatprep.subr.mxu0 0.0
    %156 = vmatpush1.msra.mxu0 0.0
    %157 = vmatprep.subr.mxu0 0.0
    %158 = vmatpush1.msra.mxu0 0.0
    %159 = vmatprep.subr.mxu0 0.0
    %160 = vmatpush1.msra.mxu0 0.0
    %161 = vmatprep.subr.mxu0 0.0
    %162 = vmatpush1.msra.mxu0 0.0
    %163 = vmatprep.subr.mxu0 0.0
    %164 = vmatpush1.msra.mxu0 0.0
    %165 = vmatprep.subr.mxu0 0.0
    %166 = vmatpush1.msra.mxu0 0.0
    %167 = vmatprep.subr.mxu0 0.0
    %168 = vmatpush1.msra.mxu0 0.0
    %169 = vmatprep.subr.mxu0 0.0
    %170 = vmatpush1.msra.mxu0 0.0
    %171 = vmatprep.subr.mxu0 0.0
    %172 = vmatpush1.msra.mxu0 0.0
    %173 = vmatprep.subr.mxu0 0.0
    %174 = vmatpush1.msra.mxu0 0.0
    %175 = vmatprep.subr.mxu0 0.0
    %176 = vmatpush1.msra.mxu0 0.0
    %177 = vmatprep.subr.mxu0 0.0
    %178 = vmatpush1.msra.mxu0 %v148
    %179 = vmatprep.subr.mxu0 0.0
    %180 = vmatpush1.msra.mxu0 %v147
    %181 = vmatprep.subr.mxu0 0.0
    %182 = vmatpush1.msra.mxu0 %v146
    %183 = vmatprep.subr.mxu0 0.0
    %184 = vmatpush1.msra.mxu0 %v145
    %185 = vmatprep.subr.mxu0 0.0
    %186 = vmatpush2.msra.mxu0 0.0
    %187 = vmatprep.subr.mxu0 0.0
    %188 = vmatpush2.msra.mxu0 0.0
    %189 = vmatprep.subr.mxu0 0.0
    %190 = vmatpush2.msra.mxu0 0.0
    %191 = vmatprep.subr.mxu0 0.0
    %192 = vmatpush2.msra.mxu0 0.0
    %193 = vmatprep.subr.mxu0 0.0
    %194 = vmatpush2.msra.mxu0 0.0
    %195 = vmatprep.subr.mxu0 0.0
    %196 = vmatpush2.msra.mxu0 0.0
    %197 = vmatprep.subr.mxu0 0.0
    %198 = vmatpush2.msra.mxu0 0.0
    %199 = vmatprep.subr.mxu0 0.0
    %200 = vmatpush2.msra.mxu0 0.0
    %201 = vmatprep.subr.mxu0 0.0
    %202 = vmatpush2.msra.mxu0 0.0
    %203 = vmatprep.subr.mxu0 0.0
    %204 = vmatpush2.msra.mxu0 0.0
    %205 = vmatprep.subr.mxu0 0.0
    %206 = vmatpush2.msra.mxu0 0.0
    %207 = vmatprep.subr.mxu0 0.0
    %208 = vmatpush2.msra.mxu0 0.0
    %209 = vmatprep.subr.mxu0 0.0
    %210 = vmatpush2.msra.mxu0 0.0
    %211 = vmatprep.subr.mxu0 0.0
    %212 = vmatpush2.msra.mxu0 0.0
    %213 = vmatprep.subr.mxu0 0.0
    %214 = vmatpush2.msra.mxu0 0.0
    %215 = vmatprep.subr.mxu0 0.0
    %216 = vmatpush2.msra.mxu0 0.0
    %217 = vmatprep.mubr.f32.mxu0 0.0
    %218 = vmatmul.mubr.f32.gmra.mxu0 %v151
    %v219 = vpop.f32.mrf.mxu0
    %v220 = vadd.f32 0.0, %v219
    %v221 = vpop.f32.mrf.mxu0
    %222 = vdwg.mxu0
    %v223 = vadd.f32 %v131, %v220
    %v224 = vtanh.pop %v223
    %225 = vst.msk [vmem:[#allocation2] sm:$0xff] %vm149, %v224
    %v226 = vld [vmem:[%s3] sm:$0xff]
    %v227 = vld [vmem:[%s3 + $0x8] sm:$0xff]
    %v228 = vld [vmem:[%s3 + $0x10] sm:$0xff]
    %v229 = vld [vmem:[%s3 + $0x18] sm:$0xff]
    %v231 = vsel %vm149, %v224, 0
    %233 = vmatprep.subr.mxu0 0.0
    %234 = vmatpush1.msra.mxu0 0.0
    %235 = vmatprep.subr.mxu0 0.0
    %236 = vmatpush1.msra.mxu0 0.0
    %237 = vmatprep.subr.mxu0 0.0
    %238 = vmatpush1.msra.mxu0 0.0
    %239 = vmatprep.subr.mxu0 0.0
    %240 = vmatpush1.msra.mxu0 0.0
    %241 = vmatprep.subr.mxu0 0.0
    %242 = vmatpush1.msra.mxu0 0.0
    %243 = vmatprep.subr.mxu0 0.0
    %244 = vmatpush1.msra.mxu0 0.0
    %245 = vmatprep.subr.mxu0 0.0
    %246 = vmatpush1.msra.mxu0 0.0
    %247 = vmatprep.subr.mxu0 0.0
    %248 = vmatpush1.msra.mxu0 0.0
    %249 = vmatprep.subr.mxu0 0.0
    %250 = vmatpush1.msra.mxu0 0.0
    %251 = vmatprep.subr.mxu0 0.0
    %252 = vmatpush1.msra.mxu0 0.0
    %253 = vmatprep.subr.mxu0 0.0
    %254 = vmatpush1.msra.mxu0 0.0
    %255 = vmatprep.subr.mxu0 0.0
    %256 = vmatpush1.msra.mxu0 0.0
    %257 = vmatprep.subr.mxu0 0.0
    %258 = vmatpush1.msra.mxu0 %v229
    %259 = vmatprep.subr.mxu0 0.0
    %260 = vmatpush1.msra.mxu0 %v228
    %261 = vmatprep.subr.mxu0 0.0
    %262 = vmatpush1.msra.mxu0 %v227
    %263 = vmatprep.subr.mxu0 0.0
    %264 = vmatpush1.msra.mxu0 %v226
    %265 = vmatprep.subr.mxu0 0.0
    %266 = vmatpush2.msra.mxu0 0.0
    %267 = vmatprep.subr.mxu0 0.0
    %268 = vmatpush2.msra.mxu0 0.0
    %269 = vmatprep.subr.mxu0 0.0
    %270 = vmatpush2.msra.mxu0 0.0
    %271 = vmatprep.subr.mxu0 0.0
    %272 = vmatpush2.msra.mxu0 0.0
    %273 = vmatprep.subr.mxu0 0.0
    %274 = vmatpush2.msra.mxu0 0.0
    %275 = vmatprep.subr.mxu0 0.0
    %276 = vmatpush2.msra.mxu0 0.0
    %277 = vmatprep.subr.mxu0 0.0
    %278 = vmatpush2.msra.mxu0 0.0
    %279 = vmatprep.subr.mxu0 0.0
    %280 = vmatpush2.msra.mxu0 0.0
    %281 = vmatprep.subr.mxu0 0.0
    %282 = vmatpush2.msra.mxu0 0.0
    %283 = vmatprep.subr.mxu0 0.0
    %284 = vmatpush2.msra.mxu0 0.0
    %285 = vmatprep.subr.mxu0 0.0
    %286 = vmatpush2.msra.mxu0 0.0
    %287 = vmatprep.subr.mxu0 0.0
    %288 = vmatpush2.msra.mxu0 0.0
    %289 = vmatprep.subr.mxu0 0.0
    %290 = vmatpush2.msra.mxu0 0.0
    %291 = vmatprep.subr.mxu0 0.0
    %292 = vmatpush2.msra.mxu0 0.0
    %293 = vmatprep.subr.mxu0 0.0
    %294 = vmatpush2.msra.mxu0 0.0
    %295 = vmatprep.subr.mxu0 0.0
    %296 = vmatpush2.msra.mxu0 0.0
    %297 = vmatprep.mubr.f32.mxu0 0.0
    %298 = vmatmul.mubr.f32.gmra.mxu0 %v231
    %v299 = vpop.f32.mrf.mxu0
    %v300 = vadd.f32 0.0, %v299
    %v301 = vpop.f32.mrf.mxu0
    %302 = vdwg.mxu0
    %v303 = vadd.f32 %v136, %v300
    %v304 = vtanh.pop %v303
    %s305 = scalar_lea.vmem [#allocation2], 8
    %306 = vst.msk [vmem:[%s305] sm:$0xff] %vm149, %v304
    %v307 = vld [vmem:[%s3] sm:$0xff]
    %v308 = vld [vmem:[%s3 + $0x8] sm:$0xff]
    %v309 = vld [vmem:[%s3 + $0x10] sm:$0xff]
    %v310 = vld [vmem:[%s3 + $0x18] sm:$0xff]
    %v312 = vsel %vm149, %v304, 0
    %314 = vmatprep.subr.mxu0 0.0
    %315 = vmatpush1.msra.mxu0 0.0
    %316 = vmatprep.subr.mxu0 0.0
    %317 = vmatpush1.msra.mxu0 0.0
    %318 = vmatprep.subr.mxu0 0.0
    %319 = vmatpush1.msra.mxu0 0.0
    %320 = vmatprep.subr.mxu0 0.0
    %321 = vmatpush1.msra.mxu0 0.0
    %322 = vmatprep.subr.mxu0 0.0
    %323 = vmatpush1.msra.mxu0 0.0
    %324 = vmatprep.subr.mxu0 0.0
    %325 = vmatpush1.msra.mxu0 0.0
    %326 = vmatprep.subr.mxu0 0.0
    %327 = vmatpush1.msra.mxu0 0.0
    %328 = vmatprep.subr.mxu0 0.0
    %329 = vmatpush1.msra.mxu0 0.0
    %330 = vmatprep.subr.mxu0 0.0
    %331 = vmatpush1.msra.mxu0 0.0
    %332 = vmatprep.subr.mxu0 0.0
    %333 = vmatpush1.msra.mxu0 0.0
    %334 = vmatprep.subr.mxu0 0.0
    %335 = vmatpush1.msra.mxu0 0.0
    %336 = vmatprep.subr.mxu0 0.0
    %337 = vmatpush1.msra.mxu0 0.0
    %338 = vmatprep.subr.mxu0 0.0
    %339 = vmatpush1.msra.mxu0 %v310
    %340 = vmatprep.subr.mxu0 0.0
    %341 = vmatpush1.msra.mxu0 %v309
    %342 = vmatprep.subr.mxu0 0.0
    %343 = vmatpush1.msra.mxu0 %v308
    %344 = vmatprep.subr.mxu0 0.0
    %345 = vmatpush1.msra.mxu0 %v307
    %346 = vmatprep.subr.mxu0 0.0
    %347 = vmatpush2.msra.mxu0 0.0
    %348 = vmatprep.subr.mxu0 0.0
    %349 = vmatpush2.msra.mxu0 0.0
    %350 = vmatprep.subr.mxu0 0.0
    %351 = vmatpush2.msra.mxu0 0.0
    %352 = vmatprep.subr.mxu0 0.0
    %353 = vmatpush2.msra.mxu0 0.0
    %354 = vmatprep.subr.mxu0 0.0
    %355 = vmatpush2.msra.mxu0 0.0
    %356 = vmatprep.subr.mxu0 0.0
    %357 = vmatpush2.msra.mxu0 0.0
    %358 = vmatprep.subr.mxu0 0.0
    %359 = vmatpush2.msra.mxu0 0.0
    %360 = vmatprep.subr.mxu0 0.0
    %361 = vmatpush2.msra.mxu0 0.0
    %362 = vmatprep.subr.mxu0 0.0
    %363 = vmatpush2.msra.mxu0 0.0
    %364 = vmatprep.subr.mxu0 0.0
    %365 = vmatpush2.msra.mxu0 0.0
    %366 = vmatprep.subr.mxu0 0.0
    %367 = vmatpush2.msra.mxu0 0.0
    %368 = vmatprep.subr.mxu0 0.0
    %369 = vmatpush2.msra.mxu0 0.0
    %370 = vmatprep.subr.mxu0 0.0
    %371 = vmatpush2.msra.mxu0 0.0
    %372 = vmatprep.subr.mxu0 0.0
    %373 = vmatpush2.msra.mxu0 0.0
    %374 = vmatprep.subr.mxu0 0.0
    %375 = vmatpush2.msra.mxu0 0.0
    %376 = vmatprep.subr.mxu0 0.0
    %377 = vmatpush2.msra.mxu0 0.0
    %378 = vmatprep.mubr.f32.mxu0 0.0
    %379 = vmatmul.mubr.f32.gmra.mxu0 %v312
    %v380 = vpop.f32.mrf.mxu0
    %v381 = vadd.f32 0.0, %v380
    %v382 = vpop.f32.mrf.mxu0
    %383 = vdwg.mxu0
    %v384 = vadd.f32 %v141, %v381
    %v385 = vtanh.pop %v384
    %s386 = scalar_lea.vmem [#allocation2], 16
    %387 = vst.msk [vmem:[%s386] sm:$0xff] %vm149, %v385
    %v388 = vld [vmem:[#allocation2] sm:$0xff]
    %v389 = vld [vmem:[#allocation2 + $0x8] sm:$0xff]
    %v390 = vld [vmem:[#allocation2 + $0x10] sm:$0xff]
    %v391 = vld [vmem:[%s5] sm:$0xff]
    %v392 = vld [vmem:[%s5 + $0x8] sm:$0xff]
    %v393 = vld [vmem:[%s5 + $0x10] sm:$0xff]
    %v394 = vld [vmem:[%s5 + $0x18] sm:$0xff]
    %v395 = vld [vmem:[%s5 + $0x20] sm:$0xff]
    %v396 = vld [vmem:[%s5 + $0x28] sm:$0xff]
    %v397 = vld [vmem:[%s5 + $0x30] sm:$0xff]
    %v398 = vld [vmem:[%s5 + $0x38] sm:$0xff]
    %v399 = vld [vmem:[%s5 + $0x40] sm:$0xff]
    %v400 = vld [vmem:[%s5 + $0x48] sm:$0xff]
    %v401 = vld [vmem:[%s5 + $0x50] sm:$0xff]
    %v402 = vld [vmem:[%s5 + $0x58] sm:$0xff]
    %v403 = vld [vmem:[%s6] sm:$0x1]
    %v404 = vld [vmem:[%s6 + $0x1] sm:$0x1]
    %v405 = vld [vmem:[%s6 + $0x2] sm:$0x1]
    %v409 = vlaneseq
    %v410 = vshrl.u32 %v409, 7
    %v411 = vsub.s32 0, %v410
    %v412 = vrot.slane %v403, %v411
    %v413 = vlaneseq
    %v414 = vshrl.u32 %v413, 7
    %v415 = vsub.s32 0, %v414
    %v416 = vrot.slane %v404, %v415
    %v417 = vlaneseq
    %v418 = vshrl.u32 %v417, 7
    %v419 = vsub.s32 0, %v418
    %v420 = vrot.slane %v405, %v419
    %v425 = vsel %vm149, %v388, 0
    %427 = vmatprep.subr.mxu0 0.0
    %428 = vmatpush1.msra.mxu0 0.0
    %429 = vmatprep.subr.mxu0 0.0
    %430 = vmatpush1.msra.mxu0 0.0
    %431 = vmatprep.subr.mxu0 0.0
    %432 = vmatpush1.msra.mxu0 0.0
    %433 = vmatprep.subr.mxu0 0.0
    %434 = vmatpush1.msra.mxu0 0.0
    %435 = vmatprep.subr.mxu0 0.0
    %436 = vmatpush1.msra.mxu0 0.0
    %437 = vmatprep.subr.mxu0 0.0
    %438 = vmatpush1.msra.mxu0 0.0
    %439 = vmatprep.subr.mxu0 0.0
    %440 = vmatpush1.msra.mxu0 0.0
    %441 = vmatprep.subr.mxu0 0.0
    %442 = vmatpush1.msra.mxu0 0.0
    %443 = vmatprep.subr.mxu0 0.0
    %444 = vmatpush1.msra.mxu0 0.0
    %445 = vmatprep.subr.mxu0 0.0
    %446 = vmatpush1.msra.mxu0 0.0
    %447 = vmatprep.subr.mxu0 0.0
    %448 = vmatpush1.msra.mxu0 0.0
    %449 = vmatprep.subr.mxu0 0.0
    %450 = vmatpush1.msra.mxu0 0.0
    %451 = vmatprep.subr.mxu0 0.0
    %452 = vmatpush1.msra.mxu0 %v394
    %453 = vmatprep.subr.mxu0 0.0
    %454 = vmatpush1.msra.mxu0 %v393
    %455 = vmatprep.subr.mxu0 0.0
    %456 = vmatpush1.msra.mxu0 %v392
    %457 = vmatprep.subr.mxu0 0.0
    %458 = vmatpush1.msra.mxu0 %v391
    %459 = vmatprep.subr.mxu0 0.0
    %460 = vmatpush2.msra.mxu0 0.0
    %461 = vmatprep.subr.mxu0 0.0
    %462 = vmatpush2.msra.mxu0 0.0
    %463 = vmatprep.subr.mxu0 0.0
    %464 = vmatpush2.msra.mxu0 0.0
    %465 = vmatprep.subr.mxu0 0.0
    %466 = vmatpush2.msra.mxu0 0.0
    %467 = vmatprep.subr.mxu0 0.0
    %468 = vmatpush2.msra.mxu0 0.0
    %469 = vmatprep.subr.mxu0 0.0
    %470 = vmatpush2.msra.mxu0 0.0
    %471 = vmatprep.subr.mxu0 0.0
    %472 = vmatpush2.msra.mxu0 0.0
    %473 = vmatprep.subr.mxu0 0.0
    %474 = vmatpush2.msra.mxu0 0.0
    %475 = vmatprep.subr.mxu0 0.0
    %476 = vmatpush2.msra.mxu0 0.0
    %477 = vmatprep.subr.mxu0 0.0
    %478 = vmatpush2.msra.mxu0 0.0
    %479 = vmatprep.subr.mxu0 0.0
    %480 = vmatpush2.msra.mxu0 0.0
    %481 = vmatprep.subr.mxu0 0.0
    %482 = vmatpush2.msra.mxu0 0.0
    %483 = vmatprep.subr.mxu0 0.0
    %484 = vmatpush2.msra.mxu0 0.0
    %485 = vmatprep.subr.mxu0 0.0
    %486 = vmatpush2.msra.mxu0 0.0
    %487 = vmatprep.subr.mxu0 0.0
    %488 = vmatpush2.msra.mxu0 0.0
    %489 = vmatprep.subr.mxu0 0.0
    %490 = vmatpush2.msra.mxu0 0.0
    %491 = vmatprep.mubr.f32.mxu0 0.0
    %492 = vmatmul.mubr.f32.gmra.mxu0 %v425
    %v493 = vpop.f32.mrf.mxu0
    %v494 = vadd.f32 %v412, %v493
    %v495 = vpop.f32.mrf.mxu0
    %496 = vdwg.mxu0
    %v498 = vsel %vm149, %v389, 0
    %500 = vmatprep.subr.mxu0 0.0
    %501 = vmatpush1.msra.mxu0 0.0
    %502 = vmatprep.subr.mxu0 0.0
    %503 = vmatpush1.msra.mxu0 0.0
    %504 = vmatprep.subr.mxu0 0.0
    %505 = vmatpush1.msra.mxu0 0.0
    %506 = vmatprep.subr.mxu0 0.0
    %507 = vmatpush1.msra.mxu0 0.0
    %508 = vmatprep.subr.mxu0 0.0
    %509 = vmatpush1.msra.mxu0 0.0
    %510 = vmatprep.subr.mxu0 0.0
    %511 = vmatpush1.msra.mxu0 0.0
    %512 = vmatprep.subr.mxu0 0.0
    %513 = vmatpush1.msra.mxu0 0.0
    %514 = vmatprep.subr.mxu0 0.0
    %515 = vmatpush1.msra.mxu0 0.0
    %516 = vmatprep.subr.mxu0 0.0
    %517 = vmatpush1.msra.mxu0 0.0
    %518 = vmatprep.subr.mxu0 0.0
    %519 = vmatpush1.msra.mxu0 0.0
    %520 = vmatprep.subr.mxu0 0.0
    %521 = vmatpush1.msra.mxu0 0.0
    %522 = vmatprep.subr.mxu0 0.0
    %523 = vmatpush1.msra.mxu0 0.0
    %524 = vmatprep.subr.mxu0 0.0
    %525 = vmatpush1.msra.mxu0 %v398
    %526 = vmatprep.subr.mxu0 0.0
    %527 = vmatpush1.msra.mxu0 %v397
    %528 = vmatprep.subr.mxu0 0.0
    %529 = vmatpush1.msra.mxu0 %v396
    %530 = vmatprep.subr.mxu0 0.0
    %531 = vmatpush1.msra.mxu0 %v395
    %532 = vmatprep.subr.mxu0 0.0
    %533 = vmatpush2.msra.mxu0 0.0
    %534 = vmatprep.subr.mxu0 0.0
    %535 = vmatpush2.msra.mxu0 0.0
    %536 = vmatprep.subr.mxu0 0.0
    %537 = vmatpush2.msra.mxu0 0.0
    %538 = vmatprep.subr.mxu0 0.0
    %539 = vmatpush2.msra.mxu0 0.0
    %540 = vmatprep.subr.mxu0 0.0
    %541 = vmatpush2.msra.mxu0 0.0
    %542 = vmatprep.subr.mxu0 0.0
    %543 = vmatpush2.msra.mxu0 0.0
    %544 = vmatprep.subr.mxu0 0.0
    %545 = vmatpush2.msra.mxu0 0.0
    %546 = vmatprep.subr.mxu0 0.0
    %547 = vmatpush2.msra.mxu0 0.0
    %548 = vmatprep.subr.mxu0 0.0
    %549 = vmatpush2.msra.mxu0 0.0
    %550 = vmatprep.subr.mxu0 0.0
    %551 = vmatpush2.msra.mxu0 0.0
    %552 = vmatprep.subr.mxu0 0.0
    %553 = vmatpush2.msra.mxu0 0.0
    %554 = vmatprep.subr.mxu0 0.0
    %555 = vmatpush2.msra.mxu0 0.0
    %556 = vmatprep.subr.mxu0 0.0
    %557 = vmatpush2.msra.mxu0 0.0
    %558 = vmatprep.subr.mxu0 0.0
    %559 = vmatpush2.msra.mxu0 0.0
    %560 = vmatprep.subr.mxu0 0.0
    %561 = vmatpush2.msra.mxu0 0.0
    %562 = vmatprep.subr.mxu0 0.0
    %563 = vmatpush2.msra.mxu0 0.0
    %564 = vmatprep.mubr.f32.mxu0 0.0
    %565 = vmatmul.mubr.f32.gmra.mxu0 %v498
    %v566 = vpop.f32.mrf.mxu0
    %v567 = vadd.f32 %v416, %v566
    %v568 = vpop.f32.mrf.mxu0
    %569 = vdwg.mxu0
    %v571 = vsel %vm149, %v390, 0
    %573 = vmatprep.subr.mxu0 0.0
    %574 = vmatpush1.msra.mxu0 0.0
    %575 = vmatprep.subr.mxu0 0.0
    %576 = vmatpush1.msra.mxu0 0.0
    %577 = vmatprep.subr.mxu0 0.0
    %578 = vmatpush1.msra.mxu0 0.0
    %579 = vmatprep.subr.mxu0 0.0
    %580 = vmatpush1.msra.mxu0 0.0
    %581 = vmatprep.subr.mxu0 0.0
    %582 = vmatpush1.msra.mxu0 0.0
    %583 = vmatprep.subr.mxu0 0.0
    %584 = vmatpush1.msra.mxu0 0.0
    %585 = vmatprep.subr.mxu0 0.0
    %586 = vmatpush1.msra.mxu0 0.0
    %587 = vmatprep.subr.mxu0 0.0
    %588 = vmatpush1.msra.mxu0 0.0
    %589 = vmatprep.subr.mxu0 0.0
    %590 = vmatpush1.msra.mxu0 0.0
    %591 = vmatprep.subr.mxu0 0.0
    %592 = vmatpush1.msra.mxu0 0.0
    %593 = vmatprep.subr.mxu0 0.0
    %594 = vmatpush1.msra.mxu0 0.0
    %595 = vmatprep.subr.mxu0 0.0
    %596 = vmatpush1.msra.mxu0 0.0
    %597 = vmatprep.subr.mxu0 0.0
    %598 = vmatpush1.msra.mxu0 %v402
    %599 = vmatprep.subr.mxu0 0.0
    %600 = vmatpush1.msra.mxu0 %v401
    %601 = vmatprep.subr.mxu0 0.0
    %602 = vmatpush1.msra.mxu0 %v400
    %603 = vmatprep.subr.mxu0 0.0
    %604 = vmatpush1.msra.mxu0 %v399
    %605 = vmatprep.subr.mxu0 0.0
    %606 = vmatpush2.msra.mxu0 0.0
    %607 = vmatprep.subr.mxu0 0.0
    %608 = vmatpush2.msra.mxu0 0.0
    %609 = vmatprep.subr.mxu0 0.0
    %610 = vmatpush2.msra.mxu0 0.0
    %611 = vmatprep.subr.mxu0 0.0
    %612 = vmatpush2.msra.mxu0 0.0
    %613 = vmatprep.subr.mxu0 0.0
    %614 = vmatpush2.msra.mxu0 0.0
    %615 = vmatprep.subr.mxu0 0.0
    %616 = vmatpush2.msra.mxu0 0.0
    %617 = vmatprep.subr.mxu0 0.0
    %618 = vmatpush2.msra.mxu0 0.0
    %619 = vmatprep.subr.mxu0 0.0
    %620 = vmatpush2.msra.mxu0 0.0
    %621 = vmatprep.subr.mxu0 0.0
    %622 = vmatpush2.msra.mxu0 0.0
    %623 = vmatprep.subr.mxu0 0.0
    %624 = vmatpush2.msra.mxu0 0.0
    %625 = vmatprep.subr.mxu0 0.0
    %626 = vmatpush2.msra.mxu0 0.0
    %627 = vmatprep.subr.mxu0 0.0
    %628 = vmatpush2.msra.mxu0 0.0
    %629 = vmatprep.subr.mxu0 0.0
    %630 = vmatpush2.msra.mxu0 0.0
    %631 = vmatprep.subr.mxu0 0.0
    %632 = vmatpush2.msra.mxu0 0.0
    %633 = vmatprep.subr.mxu0 0.0
    %634 = vmatpush2.msra.mxu0 0.0
    %635 = vmatprep.subr.mxu0 0.0
    %636 = vmatpush2.msra.mxu0 0.0
    %637 = vmatprep.mubr.f32.mxu0 0.0
    %638 = vmatmul.mubr.f32.gmra.mxu0 %v571
    %v639 = vpop.f32.mrf.mxu0
    %v640 = vadd.f32 %v420, %v639
    %v641 = vpop.f32.mrf.mxu0
    %642 = vdwg.mxu0
    %v643 = vld [vmem:[%s7] sm:$0x1]
    %v644 = vld [vmem:[%s7 + $0x1] sm:$0x1]
    %v645 = vld [vmem:[%s7 + $0x2] sm:$0x1]
    %vm646 = vcmp.gt.f32.partialorder %v643, 0.0
    %vm647 = vcmp.gt.f32.partialorder %v644, 0.0
    %vm648 = vcmp.gt.f32.partialorder %v645, 0.0
    %v649 = vsel %vm646, 1, 0
    %v650 = vsel %vm647, 1, 0
    %v651 = vsel %vm648, 1, 0
    %v652 = vlaneseq
    %v653 = vshrl.u32 %v652, 7
    %v654 = vsub.s32 0, %v653
    %v655 = vrot.slane %v649, %v654
    %v656 = vlaneseq
    %v657 = vshrl.u32 %v656, 7
    %v658 = vsub.s32 0, %v657
    %v659 = vrot.slane %v650, %v658
    %v660 = vlaneseq
    %v661 = vshrl.u32 %v660, 7
    %v662 = vsub.s32 0, %v661
    %v663 = vrot.slane %v651, %v662
    %vm664 = vcmp.eq.s32.totalorder %v655, 1
    %vm665 = vcmp.eq.s32.totalorder %v659, 1
    %vm666 = vcmp.eq.s32.totalorder %v663, 1
    %v667 = vsel %vm664, %v494, -1e+30
    %v668 = vsel %vm665, %v567, -1e+30
    %v669 = vsel %vm666, %v640, -1e+30
    %vm670 = vcmask 130048
    %v671 = vsel %vm670, %v667, -inf
    %672 = vmax.xlane.f32.xlu0 %v671
    %v673 = vpop.xlane.xlu0 %672
    %v674 = vsel %vm670, %v668, -inf
    %675 = vmax.xlane.f32.xlu0 %v674
    %v676 = vpop.xlane.xlu0 %675
    %v677 = vsel %vm670, %v669, -inf
    %678 = vmax.xlane.f32.xlu0 %v677
    %v679 = vpop.xlane.xlu0 %678
    %v680 = vsub.f32 %v667, %v673
    %v681 = vsub.f32 %v668, %v676
    %v682 = vsub.f32 %v669, %v679
    %v683 = vmul.f32 %v680, 1.442695
    %v684 = vpow.pop %v683
    %v685 = vmul.f32 %v681, 1.442695
    %v686 = vpow.pop %v685
    %v687 = vmul.f32 %v682, 1.442695
    %v688 = vpow.pop %v687
    %v689 = vsel %vm670, %v684, 0.0
    %690 = vadd.xlane.f32.xlu0 %v689
    %v691 = vpop.xlane.xlu0 %690
    %v692 = vsel %vm670, %v686, 0.0
    %693 = vadd.xlane.f32.xlu0 %v692
    %v694 = vpop.xlane.xlu0 %693
    %v695 = vsel %vm670, %v688, 0.0
    %696 = vadd.xlane.f32.xlu0 %v695
    %v697 = vpop.xlane.xlu0 %696
    %v698 = vlog2.pop %v691
    %v699 = vmul.f32 %v698, 0.6931472
    %v700 = vlog2.pop %v694
    %v701 = vmul.f32 %v700, 0.6931472
    %v702 = vlog2.pop %v697
    %v703 = vmul.f32 %v702, 0.6931472
    %v704 = vsub.f32 %v680, %v699
    %v705 = vsub.f32 %v681, %v701
    %v706 = vsub.f32 %v682, %v703
    %v707 = vld [vmem:[%s8] sm:$0xff]
    %v708 = vld [vmem:[%s8 + $0x8] sm:$0xff]
    %v709 = vld [vmem:[%s8 + $0x10] sm:$0xff]
    %v710 = vadd.f32 %v704, %v707
    %v711 = vadd.f32 %v705, %v708
    %v712 = vadd.f32 %v706, %v709
    %v713 = vsel %vm664, %v710, -1e+30
    %v714 = vsel %vm665, %v711, -1e+30
    %v715 = vsel %vm666, %v712, -1e+30
    %v716 = vlaneseq
    %v717 = vand.u32 %v716, 127
    %v718 = vsel %vm670, %v713, -inf
    %719 = vmax.xlane.f32.xlu0 %v718
    %v720 = vpop.xlane.xlu0 %719
    %v721 = vsel %vm670, %v714, -inf
    %722 = vmax.xlane.f32.xlu0 %v721
    %v723 = vpop.xlane.xlu0 %722
    %v724 = vsel %vm670, %v715, -inf
    %725 = vmax.xlane.f32.xlu0 %v724
    %v726 = vpop.xlane.xlu0 %725
    %vm727 = vcmp.ge.f32.partialorder %v713, %v720
    %vm728 = vcmp.ge.f32.partialorder %v714, %v723
    %vm729 = vcmp.ge.f32.partialorder %v715, %v726
    %v730 = vsel %vm727, %v717, 16
    %v731 = vsel %vm728, %v717, 16
    %v732 = vsel %vm729, %v717, 16
    %v733 = vsel %vm670, %v730, 2147483647
    %v734 = vand.u32 %v733, 65535
    %v735 = vshra.s32 %v733, 16
    %v736 = vcvt.s32.f32 %v734
    %v737 = vcvt.s32.f32 %v735
    %738 = vmin.xlane.f32.xlu0 %v737
    %v739 = vpop.xlane.xlu0 %738
    %vm740 = vcmp.eq.f32.partialorder %v737, %v739
    %v741 = vsel %vm740, %v736, inf
    %742 = vmin.xlane.f32.xlu0 %v741
    %v743 = vpop.xlane.xlu0 %742
    %v744 = vcvt.f32.s32 %v743
    %v745 = vcvt.f32.s32 %v739
    %v746 = vshll.u32 %v745, 16
    %v747 = vadd.s32 %v746, %v744
    %v748 = vsel %vm670, %v731, 2147483647
    %v749 = vand.u32 %v748, 65535
    %v750 = vshra.s32 %v748, 16
    %v751 = vcvt.s32.f32 %v749
    %v752 = vcvt.s32.f32 %v750
    %753 = vmin.xlane.f32.xlu0 %v752
    %v754 = vpop.xlane.xlu0 %753
    %vm755 = vcmp.eq.f32.partialorder %v752, %v754
    %v756 = vsel %vm755, %v751, inf
    %757 = vmin.xlane.f32.xlu0 %v756
    %v758 = vpop.xlane.xlu0 %757
    %v759 = vcvt.f32.s32 %v758
    %v760 = vcvt.f32.s32 %v754
    %v761 = vshll.u32 %v760, 16
    %v762 = vadd.s32 %v761, %v759
    %v763 = vsel %vm670, %v732, 2147483647
    %v764 = vand.u32 %v763, 65535
    %v765 = vshra.s32 %v763, 16
    %v766 = vcvt.s32.f32 %v764
    %v767 = vcvt.s32.f32 %v765
    %768 = vmin.xlane.f32.xlu0 %v767
    %v769 = vpop.xlane.xlu0 %768
    %vm770 = vcmp.eq.f32.partialorder %v767, %v769
    %v771 = vsel %vm770, %v766, inf
    %772 = vmin.xlane.f32.xlu0 %v771
    %v773 = vpop.xlane.xlu0 %772
    %v774 = vcvt.f32.s32 %v773
    %v775 = vcvt.f32.s32 %v769
    %v776 = vshll.u32 %v775, 16
    %v777 = vadd.s32 %v776, %v774
    %vm778 = vcmp.eq.s32.totalorder %v717, %v747
    %vm779 = vcmp.eq.s32.totalorder %v717, %v762
    %vm780 = vcmp.eq.s32.totalorder %v717, %v777
    %v781 = vsel %vm778, %v704, 0.0
    %v782 = vsel %vm779, %v705, 0.0
    %v783 = vsel %vm780, %v706, 0.0
    %v784 = vsel %vm670, %v781, 0.0
    %785 = vadd.xlane.f32.xlu0 %v784
    %v786 = vpop.xlane.xlu0 %785
    %v787 = vsel %vm670, %v782, 0.0
    %788 = vadd.xlane.f32.xlu0 %v787
    %v789 = vpop.xlane.xlu0 %788
    %v790 = vsel %vm670, %v783, 0.0
    %791 = vadd.xlane.f32.xlu0 %v790
    %v792 = vpop.xlane.xlu0 %791
    %v796 = vlaneseq
    %v797 = vshrl.u32 %v796, 7
    %v798 = vsub.s32 %v717, %v797
    %v799 = vrot.slane %v786, %v798
    %v800 = vlaneseq
    %v801 = vshrl.u32 %v800, 7
    %v802 = vsub.s32 %v717, %v801
    %v803 = vrot.slane %v789, %v802
    %v804 = vlaneseq
    %v805 = vshrl.u32 %v804, 7
    %v806 = vsub.s32 %v717, %v805
    %v807 = vrot.slane %v792, %v806
    %vm808 = vcmask 1041409
    %v809 = vsel %vm808, %v803, %v799
    %vm810 = vcmask 1042434
    %v811 = vsel %vm810, %v807, %v809
    %vm813 = vcmask 59392
    %814 = vst.msk [vmem:[#allocation3] sm:$0x7] %vm813, %v811
    %v815 = vlaneseq
    %v816 = vshrl.u32 %v815, 7
    %v817 = vsub.s32 %v717, %v816
    %v818 = vrot.slane %v747, %v817
    %v819 = vlaneseq
    %v820 = vshrl.u32 %v819, 7
    %v821 = vsub.s32 %v717, %v820
    %v822 = vrot.slane %v762, %v821
    %v823 = vlaneseq
    %v824 = vshrl.u32 %v823, 7
    %v825 = vsub.s32 %v717, %v824
    %v826 = vrot.slane %v777, %v825
    %v827 = vsel %vm808, %v822, %v818
    %v828 = vsel %vm810, %v826, %v827
    %829 = vst.msk [vmem:[#allocation5] sm:$0x7] %vm813, %v828
    // Predicated region
    $region38: #{tpu_custom_call.1} parent=1 // pred_check
      _
    $region39: #{tpu_custom_call.1} parent=1 // pred_check_branch
      %831 = sbr.rel (0) target = $region41
    $region40: #{tpu_custom_call.1} parent=1 // pred_region
      %s833 = ssub.s32 64, 64
      %834 = vsyncadd [#allocation4], %s833
      %s836 = sshll.u32 [#allocation3], 4
      %s837 = int_to_ptr.vmem [resolvable:$true] %s836
      %839 = dma.vmem_to_hbm [thread:$0]  %s837, 64, %s9, [#allocation4]
    $region41: #{tpu_custom_call.1} parent=1 // pred_fallthru
      _
    // Predicated region
    $region42: #{tpu_custom_call.1} parent=1 // pred_check
      _
    $region43: #{tpu_custom_call.1} parent=1 // pred_check_branch
      %841 = sbr.rel (0) target = $region45
    $region44: #{tpu_custom_call.1} parent=1 // pred_region
      %s843 = ssub.s32 64, 64
      %844 = vsyncadd [#allocation6], %s843
      %s846 = sshll.u32 [#allocation5], 4
      %s847 = int_to_ptr.vmem [resolvable:$true] %s846
      %849 = dma.vmem_to_hbm [thread:$0]  %s847, 64, %s10, [#allocation6]
    $region45: #{tpu_custom_call.1} parent=1 // pred_fallthru
      _
    // Predicated region
    $region46: #{tpu_custom_call.1} parent=1 // pred_check
      _
    $region47: #{tpu_custom_call.1} parent=1 // pred_check_branch
      %851 = sbr.rel (0) target = $region49
    $region48: #{tpu_custom_call.1} parent=1 // pred_region
      %852 = dma.done [#allocation4], 64
    $region49: #{tpu_custom_call.1} parent=1 // pred_fallthru
      _
    // Predicated region
    $region50: #{tpu_custom_call.1} parent=1 // pred_check
      _
    $region51: #{tpu_custom_call.1} parent=1 // pred_check_branch
      %854 = sbr.rel (0) target = $region53
    $region52: #{tpu_custom_call.1} parent=1 // pred_region
      %855 = dma.done [#allocation6], 64
    $region53: #{tpu_custom_call.1} parent=1 // pred_fallthru
      _
    %856 = vsyncpa [#allocation4], 1
    %857 = vsyncpa [#allocation6], 1

</llo_original>
